<compile_context>
chip_gen: v7x
topology: tpu7x:2x2x1
jax: 0.10.0
libtpu: 0.0.40
codegen_flags: <defaults>
</compile_context>

<pallas_src>
import functools
import math

import jax
import jax.numpy as jnp
from jax.experimental import pallas as pl
from jax.experimental.pallas import tpu as pltpu


def _mha_kernel(x_ref, wqkv_ref, bqkv_ref, wproj_ref, bproj_ref, o_ref, mha_ref,
                *, batch_tile: int, n_tok: int, num_heads: int, head_dim: int,
                scale: float):
    m, embed_dim = x_ref.shape                     # (Bt*N, E) row slab

    # ---- 1) QKV projection: one big-M bf16 MXU matmul, f32 accumulate + bias.
    qkv = jnp.dot(x_ref[...], wqkv_ref[...],
                  preferred_element_type=jnp.float32) + bqkv_ref[...]   # (M, 3E) f32

    # ---- 2) Expose the batch dim for per-(b, h) attention.  Reshapes happen
    # on f32 (sublane tile 8), then cast to bf16 for the MXU.
    q3 = (qkv[:, :embed_dim] * scale).reshape(
        batch_tile, n_tok, embed_dim).astype(jnp.bfloat16)              # (Bt, N, E)
    k3 = qkv[:, embed_dim:2 * embed_dim].reshape(
        batch_tile, n_tok, embed_dim).astype(jnp.bfloat16)
    v3 = qkv[:, 2 * embed_dim:].reshape(
        batch_tile, n_tok, embed_dim).astype(jnp.bfloat16)

    # ---- 3) Per-head attention, batched over the batch tile.  Heads are
    # written into the (M, E) bf16 concat scratch -> no per-head projection.
    for h in range(num_heads):                     # small static loop
        lo = h * head_dim
        q = q3[:, :, lo:lo + head_dim]             # (Bt, N, hd) bf16, pre-scaled
        k = k3[:, :, lo:lo + head_dim]
        v = v3[:, :, lo:lo + head_dim]

        # scores = (q * sqrt(hd)) @ k^T, contracting last dims (no transpose).
        s = jnp.einsum('bqd,bkd->bqk', q, k,
                       preferred_element_type=jnp.float32)              # (Bt, N, N) f32

        # Numerically-stable softmax in f32; approx reciprocal on the EUP.
        s_max = jnp.max(s, axis=-1, keepdims=True)
        p = jnp.exp(s - s_max)
        p = p * pl.reciprocal(jnp.sum(p, axis=-1, keepdims=True), approx=True)

        head_out = jnp.einsum('bqk,bkd->bqd', p.astype(jnp.bfloat16), v,
                              preferred_element_type=jnp.float32)       # (Bt, N, hd) f32

        mha_ref[:, lo:lo + head_dim] = head_out.reshape(
            m, head_dim).astype(jnp.bfloat16)

    # ---- 4) Single output projection with K = E (+ bias), f32 accumulate.
    out = jnp.dot(mha_ref[...], wproj_ref[...],
                  preferred_element_type=jnp.float32) + bproj_ref[...]  # (M, E) f32
    o_ref[...] = out.astype(o_ref.dtype)


def _pick_batch_tile(bs: int, n_tok: int, embed_dim: int) -> int:
    """Largest batch tile with Bt*N >= 128 (MXU M fill) that divides bs and
    keeps the per-step working set modest."""
    target = max(1, -(-128 // n_tok))              # cdiv(128, N)
    # rough f32/bf16 working set per batch element (qkv + q/k/v + scores + mha)
    per_b = n_tok * (3 * embed_dim * 4 + 3 * embed_dim * 2 + embed_dim * 2) \
        + n_tok * n_tok * 4
    cap = max(1, (6 * 1024 * 1024) // max(per_b, 1))
    bt = int(min(bs, max(1, min(target, cap))))
    while bs % bt:                                 # make the grid exact (no OOB tiles)
        bt -= 1
    return bt


def _vmem_limit_bytes() -> int:
    """~3/4 of physical VMEM: ~96 MiB on v5e/v6e (128 MiB), ~48 MiB on v7x (64 MiB)."""
    default_cap = 64 * 1024 * 1024
    try:
        cap = int(getattr(pltpu.get_tpu_info(), "vmem_capacity_bytes", default_cap))
    except Exception:
        cap = default_cap
    return int(cap * 3 // 4)


def multi_head_attention(x, w_qkv, b_qkv, w_proj, b_proj, num_heads):
    """x: (B, N, E) float32.  w_qkv: (E, 3E), b_qkv: (1, 3E),
       w_proj: (E, E), b_proj: (1, E)."""
    bs, n_tok, embed_dim = x.shape
    head_dim = embed_dim // num_heads
    scale = math.sqrt(head_dim)                    # module multiplies by sqrt(head_dim)

    bt = _pick_batch_tile(bs, n_tok, embed_dim)
    m_block = bt * n_tok
    grid = (bs // bt,)

    # bf16 operands for the MXU (halves x/weight DMA volume); biases stay f32.
    # Flatten x to (B*N, E) on the host so each grid step is a lane-dense row slab.
    x_bf = x.astype(jnp.bfloat16).reshape(bs * n_tok, embed_dim)
    wqkv_bf = w_qkv.astype(jnp.bfloat16)
    wproj_bf = w_proj.astype(jnp.bfloat16)
    bqkv_f32 = b_qkv.astype(jnp.float32)
    bproj_f32 = b_proj.astype(jnp.float32)

    kernel = functools.partial(_mha_kernel, batch_tile=bt, n_tok=n_tok,
                               num_heads=num_heads, head_dim=head_dim, scale=scale)

    out2d = pl.pallas_call(
        kernel,
        out_shape=jax.ShapeDtypeStruct((bs * n_tok, embed_dim), jnp.float32),
        grid_spec=pltpu.PrefetchScalarGridSpec(
            num_scalar_prefetch=0,
            grid=grid,
            in_specs=[
                pl.BlockSpec((m_block, embed_dim), lambda b: (b, 0)),
                pl.BlockSpec((embed_dim, 3 * embed_dim), lambda b: (0, 0)),
                pl.BlockSpec((1, 3 * embed_dim), lambda b: (0, 0)),
                pl.BlockSpec((embed_dim, embed_dim), lambda b: (0, 0)),
                pl.BlockSpec((1, embed_dim), lambda b: (0, 0)),
            ],
            out_specs=pl.BlockSpec((m_block, embed_dim), lambda b: (b, 0)),
            scratch_shapes=[pltpu.VMEM((m_block, embed_dim), jnp.bfloat16)],
        ),
        compiler_params=pltpu.CompilerParams(
            dimension_semantics=("parallel",),
            vmem_limit_bytes=_vmem_limit_bytes(),
        ),
    )(x_bf, wqkv_bf, bqkv_f32, wproj_bf, bproj_f32)

    return out2d.reshape(bs, n_tok, embed_dim)


def _reference(x, w_qkv, b_qkv, w_proj, b_proj, num_heads):
    """Pure-JAX f32 reference mirroring the PyTorch forward."""
    bs, n, e = x.shape
    hd = e // num_heads
    scale = math.sqrt(hd)
    qkv = x @ w_qkv + b_qkv                                   # (B, N, 3E)
    qkv = qkv.reshape(bs, n, 3, num_heads, hd).transpose(2, 0, 3, 1, 4)
    q, k, v = qkv[0], qkv[1], qkv[2]                          # (B, H, N, hd)
    s = jnp.einsum('bhqd,bhkd->bhqk', q, k) * scale
    p = jax.nn.softmax(s, axis=-1)
    mha = jnp.einsum('bhqk,bhkd->bhqd', p, v)                 # (B, H, N, hd)
    mha = mha.transpose(0, 2, 1, 3).reshape(bs, n, e)
    return mha @ w_proj + b_proj


if __name__ == "__main__":
    # Small shapes consistent with the module: batch=2, seq=8, embed_dim=32, heads=4
    batch, seq, embed_dim, num_heads = 2, 8, 32, 4

    key = jax.random.PRNGKey(0)
    kx, k1, k2, k3, k4 = jax.random.split(key, 5)

    x = jax.random.normal(kx, (batch, seq, embed_dim), dtype=jnp.float32)

    # Deterministic parameter init (stored as (in, out) = torch Linear weight.T)
    w_qkv = 0.02 * jax.random.normal(k1, (embed_dim, 3 * embed_dim), dtype=jnp.float32)
    b_qkv = 0.01 * jax.random.normal(k2, (1, 3 * embed_dim), dtype=jnp.float32)
    w_proj = 0.02 * jax.random.normal(k3, (embed_dim, embed_dim), dtype=jnp.float32)
    b_proj = 0.01 * jax.random.normal(k4, (1, embed_dim), dtype=jnp.float32)

    out = multi_head_attention(x, w_qkv, b_qkv, w_proj, b_proj, num_heads)
    out = jax.block_until_ready(out)

    ref = _reference(x, w_qkv, b_qkv, w_proj, b_proj, num_heads)
    assert out.shape == (batch, seq, embed_dim)
    # bf16 MXU operands + approx reciprocal -> compare against the f32 ref with
    # a tolerance well above the expected ~1e-3 relative error.
    assert jnp.allclose(out, ref, atol=2e-2, rtol=2e-2), "mismatch vs reference"

    print("KERNEL_OK")
</pallas_src>

<mosaic_0001>
module attributes {stable_mosaic.version = 11 : i64} {
  func.func @_mha_kernel(%arg0: i32, %arg1: memref<16x32xbf16, #tpu.memory_space<vmem>>, %arg2: memref<32x96xbf16, #tpu.memory_space<vmem>>, %arg3: memref<1x96xf32, #tpu.memory_space<vmem>>, %arg4: memref<32x32xbf16, #tpu.memory_space<vmem>>, %arg5: memref<1x32xf32, #tpu.memory_space<vmem>>, %arg6: memref<16x32xf32, #tpu.memory_space<vmem>>, %arg7: memref<16x32xbf16, #tpu.memory_space<vmem>>) attributes {dimension_semantics = [#tpu.dimension_semantics<parallel>], iteration_bounds = array<i64: 1>, scalar_prefetch = 0 : i64, scratch_operands = 1 : i64, tpu.core_type = #tpu.core_type<tc>, window_params = [{transform_indices = @transform_0, window_bounds = array<i64: 16, 32>}, {pipeline_mode = #tpu.pipeline_mode<synchronous>, transform_indices = @transform_1, window_bounds = array<i64: 32, 96>}, {pipeline_mode = #tpu.pipeline_mode<synchronous>, transform_indices = @transform_2, window_bounds = array<i64: 1, 96>}, {pipeline_mode = #tpu.pipeline_mode<synchronous>, transform_indices = @transform_3, window_bounds = array<i64: 32, 32>}, {pipeline_mode = #tpu.pipeline_mode<synchronous>, transform_indices = @transform_4, window_bounds = array<i64: 1, 32>}, {transform_indices = @transform_5, window_bounds = array<i64: 16, 32>}]} {
    %c0 = arith.constant 0 : index
    %c0_0 = arith.constant 0 : index
    %0 = vector.load %arg1[%c0, %c0_0] : memref<16x32xbf16, #tpu.memory_space<vmem>>, vector<16x32xbf16>
    %c0_1 = arith.constant 0 : index
    %c0_2 = arith.constant 0 : index
    %1 = vector.load %arg2[%c0_1, %c0_2] : memref<32x96xbf16, #tpu.memory_space<vmem>>, vector<32x96xbf16>
    %cst = arith.constant dense<0.000000e+00> : vector<16x96xf32>
    %2 = tpu.matmul %0, %1, %cst {dimension_numbers = #tpu.dot_dimension_numbers<[1], [0], [0], [1], [0, 0, 1, 1], [], []>} : vector<16x32xbf16>, vector<32x96xbf16>, vector<16x96xf32> -> vector<16x96xf32>
    %c0_3 = arith.constant 0 : index
    %c0_4 = arith.constant 0 : index
    %3 = vector.load %arg3[%c0_3, %c0_4] : memref<1x96xf32, #tpu.memory_space<vmem>>, vector<1x96xf32>
    %4 = vector.broadcast %3 : vector<1x96xf32> to vector<16x96xf32>
    %5 = arith.addf %2, %4 : vector<16x96xf32>
    %6 = vector.extract_strided_slice %5 {offsets = [0, 0], sizes = [16, 32], strides = [1, 1]} : vector<16x96xf32> to vector<16x32xf32>
    %cst_5 = arith.constant 2.82842708 : f32
    %7 = vector.broadcast %cst_5 : f32 to vector<16x32xf32>
    %8 = arith.mulf %6, %7 : vector<16x32xf32>
    %9 = vector.shape_cast %8 : vector<16x32xf32> to vector<2x8x32xf32>
    %10 = arith.truncf %9 : vector<2x8x32xf32> to vector<2x8x32xbf16>
    %11 = vector.extract_strided_slice %5 {offsets = [0, 32], sizes = [16, 32], strides = [1, 1]} : vector<16x96xf32> to vector<16x32xf32>
    %12 = vector.shape_cast %11 : vector<16x32xf32> to vector<2x8x32xf32>
    %13 = arith.truncf %12 : vector<2x8x32xf32> to vector<2x8x32xbf16>
    %14 = vector.extract_strided_slice %5 {offsets = [0, 64], sizes = [16, 32], strides = [1, 1]} : vector<16x96xf32> to vector<16x32xf32>
    %15 = vector.shape_cast %14 : vector<16x32xf32> to vector<2x8x32xf32>
    %16 = arith.truncf %15 : vector<2x8x32xf32> to vector<2x8x32xbf16>
    %17 = vector.extract_strided_slice %10 {offsets = [0, 0, 0], sizes = [2, 8, 8], strides = [1, 1, 1]} : vector<2x8x32xbf16> to vector<2x8x8xbf16>
    %18 = vector.extract_strided_slice %13 {offsets = [0, 0, 0], sizes = [2, 8, 8], strides = [1, 1, 1]} : vector<2x8x32xbf16> to vector<2x8x8xbf16>
    %19 = vector.extract_strided_slice %16 {offsets = [0, 0, 0], sizes = [2, 8, 8], strides = [1, 1, 1]} : vector<2x8x32xbf16> to vector<2x8x8xbf16>
    "tpu.trace_start"() <{level = 10 : i32, message = "bqd,bkd->bqk"}> : () -> ()
    %cst_6 = arith.constant dense<0.000000e+00> : vector<2x8x8xf32>
    %20 = tpu.matmul %17, %18, %cst_6 {dimension_numbers = #tpu.dot_dimension_numbers<[2], [2], [1], [1], [0, 0, 0, 1, 1, 1], [0], [0]>} : vector<2x8x8xbf16>, vector<2x8x8xbf16>, vector<2x8x8xf32> -> vector<2x8x8xf32>
    "tpu.trace_stop"() : () -> ()
    %cst_7 = arith.constant dense<0xFF800000> : vector<2x8xf32>
    %21 = vector.multi_reduction <maximumf>, %20, %cst_7 [2] : vector<2x8x8xf32> to vector<2x8xf32>
    %22 = vector.shape_cast %21 : vector<2x8xf32> to vector<2x8x1xf32>
    %23 = vector.broadcast %22 : vector<2x8x1xf32> to vector<2x8x8xf32>
    %24 = arith.subf %20, %23 : vector<2x8x8xf32>
    %25 = math.exp %24 : vector<2x8x8xf32>
    %cst_8 = arith.constant dense<0.000000e+00> : vector<2x8xf32>
    %26 = vector.multi_reduction <add>, %25, %cst_8 [2] : vector<2x8x8xf32> to vector<2x8xf32>
    %27 = vector.shape_cast %26 : vector<2x8xf32> to vector<2x8x1xf32>
    %28 = tpu.reciprocal %27 {approx = true} : vector<2x8x1xf32> -> vector<2x8x1xf32>
    %29 = vector.broadcast %28 : vector<2x8x1xf32> to vector<2x8x8xf32>
    %30 = arith.mulf %25, %29 : vector<2x8x8xf32>
    %31 = arith.truncf %30 : vector<2x8x8xf32> to vector<2x8x8xbf16>
    "tpu.trace_start"() <{level = 10 : i32, message = "bqk,bkd->bqd"}> : () -> ()
    %cst_9 = arith.constant dense<0.000000e+00> : vector<2x8x8xf32>
    %32 = tpu.matmul %31, %19, %cst_9 {dimension_numbers = #tpu.dot_dimension_numbers<[2], [1], [1], [2], [0, 0, 0, 1, 1, 2], [0], [0]>} : vector<2x8x8xbf16>, vector<2x8x8xbf16>, vector<2x8x8xf32> -> vector<2x8x8xf32>
    "tpu.trace_stop"() : () -> ()
    %33 = vector.shape_cast %32 : vector<2x8x8xf32> to vector<16x8xf32>
    %34 = arith.truncf %33 : vector<16x8xf32> to vector<16x8xbf16>
    %c0_10 = arith.constant 0 : index
    %c0_11 = arith.constant 0 : index
    %35 = vector.load %arg7[%c0_10, %c0_11] : memref<16x32xbf16, #tpu.memory_space<vmem>>, vector<16x8xbf16>
    tpu.vector_store %arg7[%c0_10, %c0_11], %34 {strides = array<i32>} : memref<16x32xbf16, #tpu.memory_space<vmem>>, vector<16x8xbf16>,
    %36 = vector.extract_strided_slice %10 {offsets = [0, 0, 8], sizes = [2, 8, 8], strides = [1, 1, 1]} : vector<2x8x32xbf16> to vector<2x8x8xbf16>
    %37 = vector.extract_strided_slice %13 {offsets = [0, 0, 8], sizes = [2, 8, 8], strides = [1, 1, 1]} : vector<2x8x32xbf16> to vector<2x8x8xbf16>
    %38 = vector.extract_strided_slice %16 {offsets = [0, 0, 8], sizes = [2, 8, 8], strides = [1, 1, 1]} : vector<2x8x32xbf16> to vector<2x8x8xbf16>
    "tpu.trace_start"() <{level = 10 : i32, message = "bqd,bkd->bqk"}> : () -> ()
    %cst_12 = arith.constant dense<0.000000e+00> : vector<2x8x8xf32>
    %39 = tpu.matmul %36, %37, %cst_12 {dimension_numbers = #tpu.dot_dimension_numbers<[2], [2], [1], [1], [0, 0, 0, 1, 1, 1], [0], [0]>} : vector<2x8x8xbf16>, vector<2x8x8xbf16>, vector<2x8x8xf32> -> vector<2x8x8xf32>
    "tpu.trace_stop"() : () -> ()
    %cst_13 = arith.constant dense<0xFF800000> : vector<2x8xf32>
    %40 = vector.multi_reduction <maximumf>, %39, %cst_13 [2] : vector<2x8x8xf32> to vector<2x8xf32>
    %41 = vector.shape_cast %40 : vector<2x8xf32> to vector<2x8x1xf32>
    %42 = vector.broadcast %41 : vector<2x8x1xf32> to vector<2x8x8xf32>
    %43 = arith.subf %39, %42 : vector<2x8x8xf32>
    %44 = math.exp %43 : vector<2x8x8xf32>
    %cst_14 = arith.constant dense<0.000000e+00> : vector<2x8xf32>
    %45 = vector.multi_reduction <add>, %44, %cst_14 [2] : vector<2x8x8xf32> to vector<2x8xf32>
    %46 = vector.shape_cast %45 : vector<2x8xf32> to vector<2x8x1xf32>
    %47 = tpu.reciprocal %46 {approx = true} : vector<2x8x1xf32> -> vector<2x8x1xf32>
    %48 = vector.broadcast %47 : vector<2x8x1xf32> to vector<2x8x8xf32>
    %49 = arith.mulf %44, %48 : vector<2x8x8xf32>
    %50 = arith.truncf %49 : vector<2x8x8xf32> to vector<2x8x8xbf16>
    "tpu.trace_start"() <{level = 10 : i32, message = "bqk,bkd->bqd"}> : () -> ()
    %cst_15 = arith.constant dense<0.000000e+00> : vector<2x8x8xf32>
    %51 = tpu.matmul %50, %38, %cst_15 {dimension_numbers = #tpu.dot_dimension_numbers<[2], [1], [1], [2], [0, 0, 0, 1, 1, 2], [0], [0]>} : vector<2x8x8xbf16>, vector<2x8x8xbf16>, vector<2x8x8xf32> -> vector<2x8x8xf32>
    "tpu.trace_stop"() : () -> ()
    %52 = vector.shape_cast %51 : vector<2x8x8xf32> to vector<16x8xf32>
    %53 = arith.truncf %52 : vector<16x8xf32> to vector<16x8xbf16>
    %c0_16 = arith.constant 0 : index
    %c8 = arith.constant 8 : index
    %54 = vector.load %arg7[%c0_16, %c8] : memref<16x32xbf16, #tpu.memory_space<vmem>>, vector<16x8xbf16>
    tpu.vector_store %arg7[%c0_16, %c8], %53 {strides = array<i32>} : memref<16x32xbf16, #tpu.memory_space<vmem>>, vector<16x8xbf16>,
    %55 = vector.extract_strided_slice %10 {offsets = [0, 0, 16], sizes = [2, 8, 8], strides = [1, 1, 1]} : vector<2x8x32xbf16> to vector<2x8x8xbf16>
    %56 = vector.extract_strided_slice %13 {offsets = [0, 0, 16], sizes = [2, 8, 8], strides = [1, 1, 1]} : vector<2x8x32xbf16> to vector<2x8x8xbf16>
    %57 = vector.extract_strided_slice %16 {offsets = [0, 0, 16], sizes = [2, 8, 8], strides = [1, 1, 1]} : vector<2x8x32xbf16> to vector<2x8x8xbf16>
    "tpu.trace_start"() <{level = 10 : i32, message = "bqd,bkd->bqk"}> : () -> ()
    %cst_17 = arith.constant dense<0.000000e+00> : vector<2x8x8xf32>
    %58 = tpu.matmul %55, %56, %cst_17 {dimension_numbers = #tpu.dot_dimension_numbers<[2], [2], [1], [1], [0, 0, 0, 1, 1, 1], [0], [0]>} : vector<2x8x8xbf16>, vector<2x8x8xbf16>, vector<2x8x8xf32> -> vector<2x8x8xf32>
    "tpu.trace_stop"() : () -> ()
    %cst_18 = arith.constant dense<0xFF800000> : vector<2x8xf32>
    %59 = vector.multi_reduction <maximumf>, %58, %cst_18 [2] : vector<2x8x8xf32> to vector<2x8xf32>
    %60 = vector.shape_cast %59 : vector<2x8xf32> to vector<2x8x1xf32>
    %61 = vector.broadcast %60 : vector<2x8x1xf32> to vector<2x8x8xf32>
    %62 = arith.subf %58, %61 : vector<2x8x8xf32>
    %63 = math.exp %62 : vector<2x8x8xf32>
    %cst_19 = arith.constant dense<0.000000e+00> : vector<2x8xf32>
    %64 = vector.multi_reduction <add>, %63, %cst_19 [2] : vector<2x8x8xf32> to vector<2x8xf32>
    %65 = vector.shape_cast %64 : vector<2x8xf32> to vector<2x8x1xf32>
    %66 = tpu.reciprocal %65 {approx = true} : vector<2x8x1xf32> -> vector<2x8x1xf32>
    %67 = vector.broadcast %66 : vector<2x8x1xf32> to vector<2x8x8xf32>
    %68 = arith.mulf %63, %67 : vector<2x8x8xf32>
    %69 = arith.truncf %68 : vector<2x8x8xf32> to vector<2x8x8xbf16>
    "tpu.trace_start"() <{level = 10 : i32, message = "bqk,bkd->bqd"}> : () -> ()
    %cst_20 = arith.constant dense<0.000000e+00> : vector<2x8x8xf32>
    %70 = tpu.matmul %69, %57, %cst_20 {dimension_numbers = #tpu.dot_dimension_numbers<[2], [1], [1], [2], [0, 0, 0, 1, 1, 2], [0], [0]>} : vector<2x8x8xbf16>, vector<2x8x8xbf16>, vector<2x8x8xf32> -> vector<2x8x8xf32>
    "tpu.trace_stop"() : () -> ()
    %71 = vector.shape_cast %70 : vector<2x8x8xf32> to vector<16x8xf32>
    %72 = arith.truncf %71 : vector<16x8xf32> to vector<16x8xbf16>
    %c0_21 = arith.constant 0 : index
    %c16 = arith.constant 16 : index
    %73 = vector.load %arg7[%c0_21, %c16] : memref<16x32xbf16, #tpu.memory_space<vmem>>, vector<16x8xbf16>
    tpu.vector_store %arg7[%c0_21, %c16], %72 {strides = array<i32>} : memref<16x32xbf16, #tpu.memory_space<vmem>>, vector<16x8xbf16>,
    %74 = vector.extract_strided_slice %10 {offsets = [0, 0, 24], sizes = [2, 8, 8], strides = [1, 1, 1]} : vector<2x8x32xbf16> to vector<2x8x8xbf16>
    %75 = vector.extract_strided_slice %13 {offsets = [0, 0, 24], sizes = [2, 8, 8], strides = [1, 1, 1]} : vector<2x8x32xbf16> to vector<2x8x8xbf16>
    %76 = vector.extract_strided_slice %16 {offsets = [0, 0, 24], sizes = [2, 8, 8], strides = [1, 1, 1]} : vector<2x8x32xbf16> to vector<2x8x8xbf16>
    "tpu.trace_start"() <{level = 10 : i32, message = "bqd,bkd->bqk"}> : () -> ()
    %cst_22 = arith.constant dense<0.000000e+00> : vector<2x8x8xf32>
    %77 = tpu.matmul %74, %75, %cst_22 {dimension_numbers = #tpu.dot_dimension_numbers<[2], [2], [1], [1], [0, 0, 0, 1, 1, 1], [0], [0]>} : vector<2x8x8xbf16>, vector<2x8x8xbf16>, vector<2x8x8xf32> -> vector<2x8x8xf32>
    "tpu.trace_stop"() : () -> ()
    %cst_23 = arith.constant dense<0xFF800000> : vector<2x8xf32>
    %78 = vector.multi_reduction <maximumf>, %77, %cst_23 [2] : vector<2x8x8xf32> to vector<2x8xf32>
    %79 = vector.shape_cast %78 : vector<2x8xf32> to vector<2x8x1xf32>
    %80 = vector.broadcast %79 : vector<2x8x1xf32> to vector<2x8x8xf32>
    %81 = arith.subf %77, %80 : vector<2x8x8xf32>
    %82 = math.exp %81 : vector<2x8x8xf32>
    %cst_24 = arith.constant dense<0.000000e+00> : vector<2x8xf32>
    %83 = vector.multi_reduction <add>, %82, %cst_24 [2] : vector<2x8x8xf32> to vector<2x8xf32>
    %84 = vector.shape_cast %83 : vector<2x8xf32> to vector<2x8x1xf32>
    %85 = tpu.reciprocal %84 {approx = true} : vector<2x8x1xf32> -> vector<2x8x1xf32>
    %86 = vector.broadcast %85 : vector<2x8x1xf32> to vector<2x8x8xf32>
    %87 = arith.mulf %82, %86 : vector<2x8x8xf32>
    %88 = arith.truncf %87 : vector<2x8x8xf32> to vector<2x8x8xbf16>
    "tpu.trace_start"() <{level = 10 : i32, message = "bqk,bkd->bqd"}> : () -> ()
    %cst_25 = arith.constant dense<0.000000e+00> : vector<2x8x8xf32>
    %89 = tpu.matmul %88, %76, %cst_25 {dimension_numbers = #tpu.dot_dimension_numbers<[2], [1], [1], [2], [0, 0, 0, 1, 1, 2], [0], [0]>} : vector<2x8x8xbf16>, vector<2x8x8xbf16>, vector<2x8x8xf32> -> vector<2x8x8xf32>
    "tpu.trace_stop"() : () -> ()
    %90 = vector.shape_cast %89 : vector<2x8x8xf32> to vector<16x8xf32>
    %91 = arith.truncf %90 : vector<16x8xf32> to vector<16x8xbf16>
    %c0_26 = arith.constant 0 : index
    %c24 = arith.constant 24 : index
    %92 = vector.load %arg7[%c0_26, %c24] : memref<16x32xbf16, #tpu.memory_space<vmem>>, vector<16x8xbf16>
    tpu.vector_store %arg7[%c0_26, %c24], %91 {strides = array<i32>} : memref<16x32xbf16, #tpu.memory_space<vmem>>, vector<16x8xbf16>,
    %c0_27 = arith.constant 0 : index
    %c0_28 = arith.constant 0 : index
    %93 = vector.load %arg7[%c0_27, %c0_28] : memref<16x32xbf16, #tpu.memory_space<vmem>>, vector<16x32xbf16>
    %c0_29 = arith.constant 0 : index
    %c0_30 = arith.constant 0 : index
    %94 = vector.load %arg4[%c0_29, %c0_30] : memref<32x32xbf16, #tpu.memory_space<vmem>>, vector<32x32xbf16>
    %cst_31 = arith.constant dense<0.000000e+00> : vector<16x32xf32>
    %95 = tpu.matmul %93, %94, %cst_31 {dimension_numbers = #tpu.dot_dimension_numbers<[1], [0], [0], [1], [0, 0, 1, 1], [], []>} : vector<16x32xbf16>, vector<32x32xbf16>, vector<16x32xf32> -> vector<16x32xf32>
    %c0_32 = arith.constant 0 : index
    %c0_33 = arith.constant 0 : index
    %96 = vector.load %arg5[%c0_32, %c0_33] : memref<1x32xf32, #tpu.memory_space<vmem>>, vector<1x32xf32>
    %97 = vector.broadcast %96 : vector<1x32xf32> to vector<16x32xf32>
    %98 = arith.addf %95, %97 : vector<16x32xf32>
    %c0_34 = arith.constant 0 : index
    %c0_35 = arith.constant 0 : index
    %99 = vector.load %arg6[%c0_34, %c0_35] : memref<16x32xf32, #tpu.memory_space<vmem>>, vector<16x32xf32>
    tpu.vector_store %arg6[%c0_34, %c0_35], %98 {strides = array<i32>} : memref<16x32xf32, #tpu.memory_space<vmem>>, vector<16x32xf32>,
    return
  }
  func.func @transform_0(%arg0: i32) -> (i32, i32) {
    %c0_i32 = arith.constant 0 : i32
    %c0_i32_0 = arith.constant 0 : i32
    return %arg0, %c0_i32 : i32, i32
  }
  func.func @transform_1(%arg0: i32) -> (i32, i32) {
    %c0_i32 = arith.constant 0 : i32
    %c0_i32_0 = arith.constant 0 : i32
    %c0_i32_1 = arith.constant 0 : i32
    return %c0_i32, %c0_i32_0 : i32, i32
  }
  func.func @transform_2(%arg0: i32) -> (i32, i32) {
    %c0_i32 = arith.constant 0 : i32
    %c0_i32_0 = arith.constant 0 : i32
    %c0_i32_1 = arith.constant 0 : i32
    return %c0_i32, %c0_i32_0 : i32, i32
  }
  func.func @transform_3(%arg0: i32) -> (i32, i32) {
    %c0_i32 = arith.constant 0 : i32
    %c0_i32_0 = arith.constant 0 : i32
    %c0_i32_1 = arith.constant 0 : i32
    return %c0_i32, %c0_i32_0 : i32, i32
  }
  func.func @transform_4(%arg0: i32) -> (i32, i32) {
    %c0_i32 = arith.constant 0 : i32
    %c0_i32_0 = arith.constant 0 : i32
    %c0_i32_1 = arith.constant 0 : i32
    return %c0_i32, %c0_i32_0 : i32, i32
  }
  func.func @transform_5(%arg0: i32) -> (i32, i32) {
    %c0_i32 = arith.constant 0 : i32
    %c0_i32_0 = arith.constant 0 : i32
    return %arg0, %c0_i32 : i32, i32
  }
}

</mosaic_0001>

<llo_original>
// kernel: tpu_custom_call.1
$region0: #{tpu_custom_call.1}
  #allocation0 [shape = 'u32[]', space=smem, size = 0x4, offset = 0x4, fixed_abs, tag = 'smem constant byte address 0x4 - core index']
  #allocation1 [shape = 'u32[144,128]{1,0:T(1,128)}', space=vmem, size = 0x12000, scoped, tag = 'internal scratch']
  #allocation2 [shape = 'bf16[16,32]{1,0:T(16,128)(2,1)}', space=vmem, size = 0x1000, scoped, tag = 'scratch operand']
  %s0 = inlined_call_operand.hbm [shape: bf16[16,32], index: 0, kind: input, shape index: {}]
  %s1 = inlined_call_operand.hbm [shape: bf16[32,96], index: 1, kind: input, shape index: {}]
  %s2 = inlined_call_operand.vmem [shape: f32[1,96], index: 2, kind: input, shape index: {}]
  %s3 = inlined_call_operand.hbm [shape: bf16[32,32], index: 3, kind: input, shape index: {}]
  %s4 = inlined_call_operand.vmem [shape: f32[1,32], index: 4, kind: input, shape index: {}]
  %s5 = inlined_call_operand.hbm [shape: f32[16,32], index: 5, kind: output, shape index: {}]
  %s6 = sld [smem:[#allocation0]]
  $region42: #{tpu_custom_call.1} parent=0
    _
  %s8 = ssub.s32 1, %s6
  %s9 = scalar_select 0, %s8, %s6
  $region1: #{tpu_custom_call.1} parent=0
    #allocation3 [shape = 'u8[4096]{0}', space=vmem, size = 0x1000, scoped, tag = 'input window, operand 0, single buffered']
    #allocation4 [shape = 's32[1]{0}', space=sflag, size = 0x4, scoped, tag = 'scoped memory for tpu_custom_call.1']
    #allocation5 [shape = 's32[1]{0}', space=sflag, size = 0x4, scoped, tag = 'scoped memory for tpu_custom_call.1']
    #allocation6 [shape = 'u8[8192]{0}', space=vmem, size = 0x2000, scoped, tag = 'input window, operand 1, single buffered']
    #allocation7 [shape = 's32[1]{0}', space=sflag, size = 0x4, scoped, tag = 'scoped memory for tpu_custom_call.1']
    #allocation8 [shape = 'u8[8192]{0}', space=vmem, size = 0x2000, scoped, tag = 'input window, operand 3, single buffered']
    #allocation9 [shape = 'u8[8192]{0}', space=vmem, size = 0x2000, scoped, tag = 'output window, operand 0, single buffered']
    %10 = vsyncpa [#allocation4], 0
    %11 = vsyncpa [#allocation7], 0
    %12 = vsyncpa [#allocation5], 0
    // Predicated region
    $region2: #{tpu_custom_call.1} parent=1 // pred_check
      _
    $region3: #{tpu_custom_call.1} parent=1 // pred_check_branch
      %14 = sbr.rel (0) target = $region5
    $region4: #{tpu_custom_call.1} parent=1 // pred_region
      %s16 = ssub.s32 128, 128
      %17 = vsyncadd [#allocation4], %s16
      %s18 = sshll.u32 [#allocation3], 4
      %s19 = int_to_ptr.vmem [resolvable:$true] %s18
      %24 = dma.hbm_to_vmem [thread:$0]  %s0, 128, %s19, [#allocation4], 64, 64, 4
    $region5: #{tpu_custom_call.1} parent=1 // pred_fallthru
      _
    // Predicated region
    $region6: #{tpu_custom_call.1} parent=1 // pred_check
      _
    $region7: #{tpu_custom_call.1} parent=1 // pred_check_branch
      %26 = sbr.rel (0) target = $region9
    $region8: #{tpu_custom_call.1} parent=1 // pred_region
      %s28 = ssub.s32 256, 256
      %29 = vsyncadd [#allocation7], %s28
      %s30 = sshll.u32 [#allocation6], 4
      %s31 = int_to_ptr.vmem [resolvable:$true] %s30
      %36 = dma.hbm_to_vmem [thread:$0]  %s1, 256, %s31, [#allocation7], 64, 64, 4
    $region9: #{tpu_custom_call.1} parent=1 // pred_fallthru
      _
    // Predicated region
    $region10: #{tpu_custom_call.1} parent=1 // pred_check
      _
    $region11: #{tpu_custom_call.1} parent=1 // pred_check_branch
      %38 = sbr.rel (0) target = $region13
    $region12: #{tpu_custom_call.1} parent=1 // pred_region
      _
    $region13: #{tpu_custom_call.1} parent=1 // pred_fallthru
      _
    // Predicated region
    $region14: #{tpu_custom_call.1} parent=1 // pred_check
      _
    $region15: #{tpu_custom_call.1} parent=1 // pred_check_branch
      %40 = sbr.rel (0) target = $region17
    $region16: #{tpu_custom_call.1} parent=1 // pred_region
      %s42 = ssub.s32 256, 256
      %43 = vsyncadd [#allocation7], %s42
      %s44 = sshll.u32 [#allocation8], 4
      %s45 = int_to_ptr.vmem [resolvable:$true] %s44
      %50 = dma.hbm_to_vmem [thread:$0]  %s3, 256, %s45, [#allocation7], 64, 64, 4
    $region17: #{tpu_custom_call.1} parent=1 // pred_fallthru
      _
    // Predicated region
    $region18: #{tpu_custom_call.1} parent=1 // pred_check
      _
    $region19: #{tpu_custom_call.1} parent=1 // pred_check_branch
      %52 = sbr.rel (0) target = $region21
    $region20: #{tpu_custom_call.1} parent=1 // pred_region
      _
    $region21: #{tpu_custom_call.1} parent=1 // pred_fallthru
      _
    // Predicated region
    $region22: #{tpu_custom_call.1} parent=1 // pred_check
      _
    $region23: #{tpu_custom_call.1} parent=1 // pred_check_branch
      %54 = sbr.rel (0) target = $region25
    $region24: #{tpu_custom_call.1} parent=1 // pred_region
      %55 = dma.done [#allocation4], 128
    $region25: #{tpu_custom_call.1} parent=1 // pred_fallthru
      _
    // Predicated region
    $region26: #{tpu_custom_call.1} parent=1 // pred_check
      _
    $region27: #{tpu_custom_call.1} parent=1 // pred_check_branch
      %57 = sbr.rel (0) target = $region29
    $region28: #{tpu_custom_call.1} parent=1 // pred_region
      %58 = dma.done [#allocation7], 256
    $region29: #{tpu_custom_call.1} parent=1 // pred_fallthru
      _
    // Predicated region
    $region30: #{tpu_custom_call.1} parent=1 // pred_check
      _
    $region31: #{tpu_custom_call.1} parent=1 // pred_check_branch
      %60 = sbr.rel (0) target = $region33
    $region32: #{tpu_custom_call.1} parent=1 // pred_region
      %61 = dma.done [#allocation7], 256
    $region33: #{tpu_custom_call.1} parent=1 // pred_fallthru
      _
    %v63 = vld [vmem:[#allocation3] sm:$0xf]
    %v64 = vld [vmem:[#allocation3 + $0x4] sm:$0xf]
    %v65 = vld [vmem:[#allocation6] sm:$0xf]
    %v66 = vld [vmem:[#allocation6 + $0x4] sm:$0xf]
    %v67 = vld [vmem:[#allocation6 + $0x8] sm:$0xf]
    %v68 = vld [vmem:[#allocation6 + $0xc] sm:$0xf]
    %v69 = vld [vmem:[%s2] sm:$0x1]
    %v71 = vlaneseq
    %v72 = vshrl.u32 %v71, 7
    %v73 = vsub.s32 0, %v72
    %v74 = vrot.slane %v69, %v73
    %v78 = vunpack.c.l.b16 %v63
    %v79 = vunpack.c.l.b16 %v64
    %v80 = vpack.c.b16 %v79, %v78
    %v85 = vunpack.c.l.b16 %v65
    %v86 = vunpack.c.l.b16 %v66
    %v87 = vunpack.c.l.b16 %v67
    %v88 = vunpack.c.l.b16 %v68
    %v89 = vpack.c.b16 %v86, %v85
    %v90 = vpack.c.b16 %v88, %v87
    %vm93 = vcmask 261120
    %v95 = vsel %vm93, %v80, 0
    %97 = vmatprep.subr.bf16.mxu0 0
    %98 = vmatpush1.bf16.msra.mxu0 %v89
    %99 = vmatprep.subr.bf16.mxu0 0
    %100 = vmatpush1.bf16.msra.mxu0 %v90
    %101 = vmatprep.subr.bf16.mxu0 0
    %102 = vmatpush1.bf16.msra.mxu0 0
    %103 = vmatprep.subr.bf16.mxu0 0
    %104 = vmatpush1.bf16.msra.mxu0 0
    %105 = vmatprep.subr.bf16.mxu0 0
    %106 = vmatpush1.bf16.msra.mxu0 0
    %107 = vmatprep.subr.bf16.mxu0 0
    %108 = vmatpush1.bf16.msra.mxu0 0
    %109 = vmatprep.subr.bf16.mxu0 0
    %110 = vmatpush1.bf16.msra.mxu0 0
    %111 = vmatprep.subr.bf16.mxu0 0
    %112 = vmatpush1.bf16.msra.mxu0 0
    %113 = vmatprep.subr.bf16.mxu0 0
    %114 = vmatpush1.bf16.msra.mxu0 0
    %115 = vmatprep.subr.bf16.mxu0 0
    %116 = vmatpush1.bf16.msra.mxu0 0
    %117 = vmatprep.subr.bf16.mxu0 0
    %118 = vmatpush1.bf16.msra.mxu0 0
    %119 = vmatprep.subr.bf16.mxu0 0
    %120 = vmatpush1.bf16.msra.mxu0 0
    %121 = vmatprep.subr.bf16.mxu0 0
    %122 = vmatpush1.bf16.msra.mxu0 0
    %123 = vmatprep.subr.bf16.mxu0 0
    %124 = vmatpush1.bf16.msra.mxu0 0
    %125 = vmatprep.subr.bf16.mxu0 0
    %126 = vmatpush1.bf16.msra.mxu0 0
    %127 = vmatprep.subr.bf16.mxu0 0
    %128 = vmatpush1.bf16.msra.mxu0 0
    %129 = vmatprep.mubr.bf16.mxu0 0
    %130 = vmatmul.mubr.bf16.gmra.mrb[0].mxu0 %v95
    %v131 = vpop.f32.mrb[0].mxu0
    %v132 = vadd.f32 %v74, %v131
    %v133 = vpop.f32.mrb[0].mxu0
    %v134 = vpop.f32.mrb[0].mxu0
    %v135 = vadd.f32 %v74, %v134
    %v136 = vpop.f32.mrb[0].mxu0
    %137 = vdwg.mxu0
    %v138 = vmul.f32 %v132, 2.828427
    %v139 = vmul.f32 %v135, 2.828427
    %v140 = vpack.c.bf16 %v138, %v138
    %v141 = vpack.c.bf16 %v139, %v139
    %v142 = vpack.c.bf16 %v132, %v132
    %v143 = vpack.c.bf16 %v135, %v135
    %145 = vrot.lane.b32.xlu0 %v142, 96
    %v146 = vpop.permute.xlu0 %145
    %vm147 = vcmask 64512
    %v149 = vsel %vm147, %v140, 0
    %v152 = vsel %vm147, %v146, 0
    %154 = vmatprep.subr.bf16.mxu0 0
    %155 = vmatpush1.bf16.xpose.msra.mxu0 %v152
    %156 = vmatprep.subr.bf16.mxu0 0
    %157 = vmatpush1.bf16.xpose.msra.mxu0 0
    %158 = vmatprep.subr.bf16.mxu0 0
    %159 = vmatpush1.bf16.xpose.msra.mxu0 0
    %160 = vmatprep.subr.bf16.mxu0 0
    %161 = vmatpush1.bf16.xpose.msra.mxu0 0
    %162 = vmatprep.subr.bf16.mxu0 0
    %163 = vmatpush1.bf16.xpose.msra.mxu0 0
    %164 = vmatprep.subr.bf16.mxu0 0
    %165 = vmatpush1.bf16.xpose.msra.mxu0 0
    %166 = vmatprep.subr.bf16.mxu0 0
    %167 = vmatpush1.bf16.xpose.msra.mxu0 0
    %168 = vmatprep.subr.bf16.mxu0 0
    %169 = vmatpush1.bf16.xpose.msra.mxu0 0
    %170 = vmatprep.subr.bf16.mxu0 0
    %171 = vmatpush1.bf16.xpose.msra.mxu0 0
    %172 = vmatprep.subr.bf16.mxu0 0
    %173 = vmatpush1.bf16.xpose.msra.mxu0 0
    %174 = vmatprep.subr.bf16.mxu0 0
    %175 = vmatpush1.bf16.xpose.msra.mxu0 0
    %176 = vmatprep.subr.bf16.mxu0 0
    %177 = vmatpush1.bf16.xpose.msra.mxu0 0
    %178 = vmatprep.subr.bf16.mxu0 0
    %179 = vmatpush1.bf16.xpose.msra.mxu0 0
    %180 = vmatprep.subr.bf16.mxu0 0
    %181 = vmatpush1.bf16.xpose.msra.mxu0 0
    %182 = vmatprep.subr.bf16.mxu0 0
    %183 = vmatpush1.bf16.xpose.msra.mxu0 0
    %184 = vmatprep.subr.bf16.mxu0 0
    %185 = vmatpush1.bf16.xpose.msra.mxu0 0
    %186 = vmatprep.mubr.bf16.mxu0 0
    %187 = vmatmul.mubr.bf16.gmra.mrb[0].mxu0 %v149
    %v188 = vpop.f32.mrb[0].mxu0
    %v189 = vadd.f32 0.0, %v188
    %v190 = vpop.f32.mrb[0].mxu0
    %v191 = vpop.f32.mrb[0].mxu0
    %v192 = vpop.f32.mrb[0].mxu0
    %193 = vdwg.mxu0
    %195 = vrot.lane.b32.xlu0 %v143, 96
    %v196 = vpop.permute.xlu0 %195
    %v198 = vsel %vm147, %v141, 0
    %v201 = vsel %vm147, %v196, 0
    %203 = vmatprep.subr.bf16.mxu0 0
    %204 = vmatpush1.bf16.xpose.msra.mxu0 %v201
    %205 = vmatprep.subr.bf16.mxu0 0
    %206 = vmatpush1.bf16.xpose.msra.mxu0 0
    %207 = vmatprep.subr.bf16.mxu0 0
    %208 = vmatpush1.bf16.xpose.msra.mxu0 0
    %209 = vmatprep.subr.bf16.mxu0 0
    %210 = vmatpush1.bf16.xpose.msra.mxu0 0
    %211 = vmatprep.subr.bf16.mxu0 0
    %212 = vmatpush1.bf16.xpose.msra.mxu0 0
    %213 = vmatprep.subr.bf16.mxu0 0
    %214 = vmatpush1.bf16.xpose.msra.mxu0 0
    %215 = vmatprep.subr.bf16.mxu0 0
    %216 = vmatpush1.bf16.xpose.msra.mxu0 0
    %217 = vmatprep.subr.bf16.mxu0 0
    %218 = vmatpush1.bf16.xpose.msra.mxu0 0
    %219 = vmatprep.subr.bf16.mxu0 0
    %220 = vmatpush1.bf16.xpose.msra.mxu0 0
    %221 = vmatprep.subr.bf16.mxu0 0
    %222 = vmatpush1.bf16.xpose.msra.mxu0 0
    %223 = vmatprep.subr.bf16.mxu0 0
    %224 = vmatpush1.bf16.xpose.msra.mxu0 0
    %225 = vmatprep.subr.bf16.mxu0 0
    %226 = vmatpush1.bf16.xpose.msra.mxu0 0
    %227 = vmatprep.subr.bf16.mxu0 0
    %228 = vmatpush1.bf16.xpose.msra.mxu0 0
    %229 = vmatprep.subr.bf16.mxu0 0
    %230 = vmatpush1.bf16.xpose.msra.mxu0 0
    %231 = vmatprep.subr.bf16.mxu0 0
    %232 = vmatpush1.bf16.xpose.msra.mxu0 0
    %233 = vmatprep.subr.bf16.mxu0 0
    %234 = vmatpush1.bf16.xpose.msra.mxu0 0
    %235 = vmatprep.mubr.bf16.mxu0 0
    %236 = vmatmul.mubr.bf16.gmra.mrb[0].mxu0 %v198
    %v237 = vpop.f32.mrb[0].mxu0
    %v238 = vadd.f32 0.0, %v237
    %v239 = vpop.f32.mrb[0].mxu0
    %v240 = vpop.f32.mrb[0].mxu0
    %v241 = vpop.f32.mrb[0].mxu0
    %242 = vdwg.mxu0
    %v243 = vsel %vm147, %v189, -inf
    %244 = vmax.xlane.f32.xlu0 %v243
    %v245 = vpop.xlane.xlu0 %244
    %v246 = vsel %vm147, %v238, -inf
    %247 = vmax.xlane.f32.xlu0 %v246
    %v248 = vpop.xlane.xlu0 %247
    %v249 = vsub.f32 %v189, %v245
    %v250 = vsub.f32 %v238, %v248
    %v251 = vmul.f32 %v249, 1.442695
    %v252 = vpow.pop %v251
    %v253 = vmul.f32 %v250, 1.442695
    %v254 = vpow.pop %v253
    %v255 = vsel %vm147, %v252, 0.0
    %256 = vadd.xlane.f32.xlu0 %v255
    %v257 = vpop.xlane.xlu0 %256
    %v258 = vsel %vm147, %v254, 0.0
    %259 = vadd.xlane.f32.xlu0 %v258
    %v260 = vpop.xlane.xlu0 %259
    %v261 = vrcp.pop %v257
    %v262 = vrcp.pop %v260
    %v263 = vmul.f32 %v252, %v261
    %v264 = vmul.f32 %v254, %v262
    %v265 = vpack.c.bf16 %v263, %v263
    %v266 = vpack.c.bf16 %v264, %v264
    %267 = vrot.lane.b32.xlu0 %v142, 64
    %v268 = vpop.permute.xlu0 %267
    %v270 = vsel %vm147, %v265, 0
    %vm272 = vcmask 1043456
    %v274 = vsel %vm272, %v268, 0
    %276 = vmatprep.subr.bf16.mxu0 0
    %277 = vmatpush1.bf16.msra.mxu0 %v274
    %278 = vmatprep.subr.bf16.mxu0 0
    %279 = vmatpush1.bf16.msra.mxu0 0
    %280 = vmatprep.subr.bf16.mxu0 0
    %281 = vmatpush1.bf16.msra.mxu0 0
    %282 = vmatprep.subr.bf16.mxu0 0
    %283 = vmatpush1.bf16.msra.mxu0 0
    %284 = vmatprep.subr.bf16.mxu0 0
    %285 = vmatpush1.bf16.msra.mxu0 0
    %286 = vmatprep.subr.bf16.mxu0 0
    %287 = vmatpush1.bf16.msra.mxu0 0
    %288 = vmatprep.subr.bf16.mxu0 0
    %289 = vmatpush1.bf16.msra.mxu0 0
    %290 = vmatprep.subr.bf16.mxu0 0
    %291 = vmatpush1.bf16.msra.mxu0 0
    %292 = vmatprep.subr.bf16.mxu0 0
    %293 = vmatpush1.bf16.msra.mxu0 0
    %294 = vmatprep.subr.bf16.mxu0 0
    %295 = vmatpush1.bf16.msra.mxu0 0
    %296 = vmatprep.subr.bf16.mxu0 0
    %297 = vmatpush1.bf16.msra.mxu0 0
    %298 = vmatprep.subr.bf16.mxu0 0
    %299 = vmatpush1.bf16.msra.mxu0 0
    %300 = vmatprep.subr.bf16.mxu0 0
    %301 = vmatpush1.bf16.msra.mxu0 0
    %302 = vmatprep.subr.bf16.mxu0 0
    %303 = vmatpush1.bf16.msra.mxu0 0
    %304 = vmatprep.subr.bf16.mxu0 0
    %305 = vmatpush1.bf16.msra.mxu0 0
    %306 = vmatprep.subr.bf16.mxu0 0
    %307 = vmatpush1.bf16.msra.mxu0 0
    %308 = vmatprep.mubr.bf16.mxu0 0
    %309 = vmatmul.mubr.bf16.gmra.mrb[0].mxu0 %v270
    %v310 = vpop.f32.mrb[0].mxu0
    %v311 = vadd.f32 0.0, %v310
    %v312 = vpop.f32.mrb[0].mxu0
    %v313 = vpop.f32.mrb[0].mxu0
    %v314 = vpop.f32.mrb[0].mxu0
    %315 = vdwg.mxu0
    %316 = vrot.lane.b32.xlu0 %v143, 64
    %v317 = vpop.permute.xlu0 %316
    %v319 = vsel %vm147, %v266, 0
    %v322 = vsel %vm272, %v317, 0
    %324 = vmatprep.subr.bf16.mxu0 0
    %325 = vmatpush1.bf16.msra.mxu0 %v322
    %326 = vmatprep.subr.bf16.mxu0 0
    %327 = vmatpush1.bf16.msra.mxu0 0
    %328 = vmatprep.subr.bf16.mxu0 0
    %329 = vmatpush1.bf16.msra.mxu0 0
    %330 = vmatprep.subr.bf16.mxu0 0
    %331 = vmatpush1.bf16.msra.mxu0 0
    %332 = vmatprep.subr.bf16.mxu0 0
    %333 = vmatpush1.bf16.msra.mxu0 0
    %334 = vmatprep.subr.bf16.mxu0 0
    %335 = vmatpush1.bf16.msra.mxu0 0
    %336 = vmatprep.subr.bf16.mxu0 0
    %337 = vmatpush1.bf16.msra.mxu0 0
    %338 = vmatprep.subr.bf16.mxu0 0
    %339 = vmatpush1.bf16.msra.mxu0 0
    %340 = vmatprep.subr.bf16.mxu0 0
    %341 = vmatpush1.bf16.msra.mxu0 0
    %342 = vmatprep.subr.bf16.mxu0 0
    %343 = vmatpush1.bf16.msra.mxu0 0
    %344 = vmatprep.subr.bf16.mxu0 0
    %345 = vmatpush1.bf16.msra.mxu0 0
    %346 = vmatprep.subr.bf16.mxu0 0
    %347 = vmatpush1.bf16.msra.mxu0 0
    %348 = vmatprep.subr.bf16.mxu0 0
    %349 = vmatpush1.bf16.msra.mxu0 0
    %350 = vmatprep.subr.bf16.mxu0 0
    %351 = vmatpush1.bf16.msra.mxu0 0
    %352 = vmatprep.subr.bf16.mxu0 0
    %353 = vmatpush1.bf16.msra.mxu0 0
    %354 = vmatprep.subr.bf16.mxu0 0
    %355 = vmatpush1.bf16.msra.mxu0 0
    %356 = vmatprep.mubr.bf16.mxu0 0
    %357 = vmatmul.mubr.bf16.gmra.mrb[0].mxu0 %v319
    %v358 = vpop.f32.mrb[0].mxu0
    %v359 = vadd.f32 0.0, %v358
    %v360 = vpop.f32.mrb[0].mxu0
    %v361 = vpop.f32.mrb[0].mxu0
    %v362 = vpop.f32.mrb[0].mxu0
    %363 = vdwg.mxu0
    %v364 = vpack.c.bf16 %v359, %v311
    %365 = vst.msk [vmem:[#allocation2] sm:$0xff] %vm147, %v364
    %367 = vrot.lane.b32.xlu0 %v140, 120
    %v368 = vpop.permute.xlu0 %367
    %369 = vrot.lane.b32.xlu0 %v142, 88
    %v370 = vpop.permute.xlu0 %369
    %v372 = vsel %vm147, %v368, 0
    %v375 = vsel %vm147, %v370, 0
    %377 = vmatprep.subr.bf16.mxu0 0
    %378 = vmatpush1.bf16.xpose.msra.mxu0 %v375
    %379 = vmatprep.subr.bf16.mxu0 0
    %380 = vmatpush1.bf16.xpose.msra.mxu0 0
    %381 = vmatprep.subr.bf16.mxu0 0
    %382 = vmatpush1.bf16.xpose.msra.mxu0 0
    %383 = vmatprep.subr.bf16.mxu0 0
    %384 = vmatpush1.bf16.xpose.msra.mxu0 0
    %385 = vmatprep.subr.bf16.mxu0 0
    %386 = vmatpush1.bf16.xpose.msra.mxu0 0
    %387 = vmatprep.subr.bf16.mxu0 0
    %388 = vmatpush1.bf16.xpose.msra.mxu0 0
    %389 = vmatprep.subr.bf16.mxu0 0
    %390 = vmatpush1.bf16.xpose.msra.mxu0 0
    %391 = vmatprep.subr.bf16.mxu0 0
    %392 = vmatpush1.bf16.xpose.msra.mxu0 0
    %393 = vmatprep.subr.bf16.mxu0 0
    %394 = vmatpush1.bf16.xpose.msra.mxu0 0
    %395 = vmatprep.subr.bf16.mxu0 0
    %396 = vmatpush1.bf16.xpose.msra.mxu0 0
    %397 = vmatprep.subr.bf16.mxu0 0
    %398 = vmatpush1.bf16.xpose.msra.mxu0 0
    %399 = vmatprep.subr.bf16.mxu0 0
    %400 = vmatpush1.bf16.xpose.msra.mxu0 0
    %401 = vmatprep.subr.bf16.mxu0 0
    %402 = vmatpush1.bf16.xpose.msra.mxu0 0
    %403 = vmatprep.subr.bf16.mxu0 0
    %404 = vmatpush1.bf16.xpose.msra.mxu0 0
    %405 = vmatprep.subr.bf16.mxu0 0
    %406 = vmatpush1.bf16.xpose.msra.mxu0 0
    %407 = vmatprep.subr.bf16.mxu0 0
    %408 = vmatpush1.bf16.xpose.msra.mxu0 0
    %409 = vmatprep.mubr.bf16.mxu0 0
    %410 = vmatmul.mubr.bf16.gmra.mrb[0].mxu0 %v372
    %v411 = vpop.f32.mrb[0].mxu0
    %v412 = vadd.f32 0.0, %v411
    %v413 = vpop.f32.mrb[0].mxu0
    %v414 = vpop.f32.mrb[0].mxu0
    %v415 = vpop.f32.mrb[0].mxu0
    %416 = vdwg.mxu0
    %418 = vrot.lane.b32.xlu0 %v141, 120
    %v419 = vpop.permute.xlu0 %418
    %420 = vrot.lane.b32.xlu0 %v143, 88
    %v421 = vpop.permute.xlu0 %420
    %v423 = vsel %vm147, %v419, 0
    %v426 = vsel %vm147, %v421, 0
    %428 = vmatprep.subr.bf16.mxu0 0
    %429 = vmatpush1.bf16.xpose.msra.mxu0 %v426
    %430 = vmatprep.subr.bf16.mxu0 0
    %431 = vmatpush1.bf16.xpose.msra.mxu0 0
    %432 = vmatprep.subr.bf16.mxu0 0
    %433 = vmatpush1.bf16.xpose.msra.mxu0 0
    %434 = vmatprep.subr.bf16.mxu0 0
    %435 = vmatpush1.bf16.xpose.msra.mxu0 0
    %436 = vmatprep.subr.bf16.mxu0 0
    %437 = vmatpush1.bf16.xpose.msra.mxu0 0
    %438 = vmatprep.subr.bf16.mxu0 0
    %439 = vmatpush1.bf16.xpose.msra.mxu0 0
    %440 = vmatprep.subr.bf16.mxu0 0
    %441 = vmatpush1.bf16.xpose.msra.mxu0 0
    %442 = vmatprep.subr.bf16.mxu0 0
    %443 = vmatpush1.bf16.xpose.msra.mxu0 0
    %444 = vmatprep.subr.bf16.mxu0 0
    %445 = vmatpush1.bf16.xpose.msra.mxu0 0
    %446 = vmatprep.subr.bf16.mxu0 0
    %447 = vmatpush1.bf16.xpose.msra.mxu0 0
    %448 = vmatprep.subr.bf16.mxu0 0
    %449 = vmatpush1.bf16.xpose.msra.mxu0 0
    %450 = vmatprep.subr.bf16.mxu0 0
    %451 = vmatpush1.bf16.xpose.msra.mxu0 0
    %452 = vmatprep.subr.bf16.mxu0 0
    %453 = vmatpush1.bf16.xpose.msra.mxu0 0
    %454 = vmatprep.subr.bf16.mxu0 0
    %455 = vmatpush1.bf16.xpose.msra.mxu0 0
    %456 = vmatprep.subr.bf16.mxu0 0
    %457 = vmatpush1.bf16.xpose.msra.mxu0 0
    %458 = vmatprep.subr.bf16.mxu0 0
    %459 = vmatpush1.bf16.xpose.msra.mxu0 0
    %460 = vmatprep.mubr.bf16.mxu0 0
    %461 = vmatmul.mubr.bf16.gmra.mrb[0].mxu0 %v423
    %v462 = vpop.f32.mrb[0].mxu0
    %v463 = vadd.f32 0.0, %v462
    %v464 = vpop.f32.mrb[0].mxu0
    %v465 = vpop.f32.mrb[0].mxu0
    %v466 = vpop.f32.mrb[0].mxu0
    %467 = vdwg.mxu0
    %v468 = vsel %vm147, %v412, -inf
    %469 = vmax.xlane.f32.xlu0 %v468
    %v470 = vpop.xlane.xlu0 %469
    %v471 = vsel %vm147, %v463, -inf
    %472 = vmax.xlane.f32.xlu0 %v471
    %v473 = vpop.xlane.xlu0 %472
    %v474 = vsub.f32 %v412, %v470
    %v475 = vsub.f32 %v463, %v473
    %v476 = vmul.f32 %v474, 1.442695
    %v477 = vpow.pop %v476
    %v478 = vmul.f32 %v475, 1.442695
    %v479 = vpow.pop %v478
    %v480 = vsel %vm147, %v477, 0.0
    %481 = vadd.xlane.f32.xlu0 %v480
    %v482 = vpop.xlane.xlu0 %481
    %v483 = vsel %vm147, %v479, 0.0
    %484 = vadd.xlane.f32.xlu0 %v483
    %v485 = vpop.xlane.xlu0 %484
    %v486 = vrcp.pop %v482
    %v487 = vrcp.pop %v485
    %v488 = vmul.f32 %v477, %v486
    %v489 = vmul.f32 %v479, %v487
    %v490 = vpack.c.bf16 %v488, %v488
    %v491 = vpack.c.bf16 %v489, %v489
    %492 = vrot.lane.b32.xlu0 %v142, 56
    %v493 = vpop.permute.xlu0 %492
    %v495 = vsel %vm147, %v490, 0
    %v498 = vsel %vm272, %v493, 0
    %500 = vmatprep.subr.bf16.mxu0 0
    %501 = vmatpush1.bf16.msra.mxu0 %v498
    %502 = vmatprep.subr.bf16.mxu0 0
    %503 = vmatpush1.bf16.msra.mxu0 0
    %504 = vmatprep.subr.bf16.mxu0 0
    %505 = vmatpush1.bf16.msra.mxu0 0
    %506 = vmatprep.subr.bf16.mxu0 0
    %507 = vmatpush1.bf16.msra.mxu0 0
    %508 = vmatprep.subr.bf16.mxu0 0
    %509 = vmatpush1.bf16.msra.mxu0 0
    %510 = vmatprep.subr.bf16.mxu0 0
    %511 = vmatpush1.bf16.msra.mxu0 0
    %512 = vmatprep.subr.bf16.mxu0 0
    %513 = vmatpush1.bf16.msra.mxu0 0
    %514 = vmatprep.subr.bf16.mxu0 0
    %515 = vmatpush1.bf16.msra.mxu0 0
    %516 = vmatprep.subr.bf16.mxu0 0
    %517 = vmatpush1.bf16.msra.mxu0 0
    %518 = vmatprep.subr.bf16.mxu0 0
    %519 = vmatpush1.bf16.msra.mxu0 0
    %520 = vmatprep.subr.bf16.mxu0 0
    %521 = vmatpush1.bf16.msra.mxu0 0
    %522 = vmatprep.subr.bf16.mxu0 0
    %523 = vmatpush1.bf16.msra.mxu0 0
    %524 = vmatprep.subr.bf16.mxu0 0
    %525 = vmatpush1.bf16.msra.mxu0 0
    %526 = vmatprep.subr.bf16.mxu0 0
    %527 = vmatpush1.bf16.msra.mxu0 0
    %528 = vmatprep.subr.bf16.mxu0 0
    %529 = vmatpush1.bf16.msra.mxu0 0
    %530 = vmatprep.subr.bf16.mxu0 0
    %531 = vmatpush1.bf16.msra.mxu0 0
    %532 = vmatprep.mubr.bf16.mxu0 0
    %533 = vmatmul.mubr.bf16.gmra.mrb[0].mxu0 %v495
    %v534 = vpop.f32.mrb[0].mxu0
    %v535 = vadd.f32 0.0, %v534
    %v536 = vpop.f32.mrb[0].mxu0
    %v537 = vpop.f32.mrb[0].mxu0
    %v538 = vpop.f32.mrb[0].mxu0
    %539 = vdwg.mxu0
    %540 = vrot.lane.b32.xlu0 %v143, 56
    %v541 = vpop.permute.xlu0 %540
    %v543 = vsel %vm147, %v491, 0
    %v546 = vsel %vm272, %v541, 0
    %548 = vmatprep.subr.bf16.mxu0 0
    %549 = vmatpush1.bf16.msra.mxu0 %v546
    %550 = vmatprep.subr.bf16.mxu0 0
    %551 = vmatpush1.bf16.msra.mxu0 0
    %552 = vmatprep.subr.bf16.mxu0 0
    %553 = vmatpush1.bf16.msra.mxu0 0
    %554 = vmatprep.subr.bf16.mxu0 0
    %555 = vmatpush1.bf16.msra.mxu0 0
    %556 = vmatprep.subr.bf16.mxu0 0
    %557 = vmatpush1.bf16.msra.mxu0 0
    %558 = vmatprep.subr.bf16.mxu0 0
    %559 = vmatpush1.bf16.msra.mxu0 0
    %560 = vmatprep.subr.bf16.mxu0 0
    %561 = vmatpush1.bf16.msra.mxu0 0
    %562 = vmatprep.subr.bf16.mxu0 0
    %563 = vmatpush1.bf16.msra.mxu0 0
    %564 = vmatprep.subr.bf16.mxu0 0
    %565 = vmatpush1.bf16.msra.mxu0 0
    %566 = vmatprep.subr.bf16.mxu0 0
    %567 = vmatpush1.bf16.msra.mxu0 0
    %568 = vmatprep.subr.bf16.mxu0 0
    %569 = vmatpush1.bf16.msra.mxu0 0
    %570 = vmatprep.subr.bf16.mxu0 0
    %571 = vmatpush1.bf16.msra.mxu0 0
    %572 = vmatprep.subr.bf16.mxu0 0
    %573 = vmatpush1.bf16.msra.mxu0 0
    %574 = vmatprep.subr.bf16.mxu0 0
    %575 = vmatpush1.bf16.msra.mxu0 0
    %576 = vmatprep.subr.bf16.mxu0 0
    %577 = vmatpush1.bf16.msra.mxu0 0
    %578 = vmatprep.subr.bf16.mxu0 0
    %579 = vmatpush1.bf16.msra.mxu0 0
    %580 = vmatprep.mubr.bf16.mxu0 0
    %581 = vmatmul.mubr.bf16.gmra.mrb[0].mxu0 %v543
    %v582 = vpop.f32.mrb[0].mxu0
    %v583 = vadd.f32 0.0, %v582
    %v584 = vpop.f32.mrb[0].mxu0
    %v585 = vpop.f32.mrb[0].mxu0
    %v586 = vpop.f32.mrb[0].mxu0
    %587 = vdwg.mxu0
    %v588 = vpack.c.bf16 %v583, %v535
    %590 = vrot.lane.b32.xlu0 %v588, 8
    %v591 = vpop.permute.xlu0 %590
    %vm593 = vcmask 130112
    %594 = vst.msk [vmem:[#allocation2] sm:$0xff] %vm593, %v591
    %595 = vrot.lane.b32.xlu0 %v140, 112
    %v596 = vpop.permute.xlu0 %595
    %597 = vrot.lane.b32.xlu0 %v142, 80
    %v598 = vpop.permute.xlu0 %597
    %v600 = vsel %vm147, %v596, 0
    %v603 = vsel %vm147, %v598, 0
    %605 = vmatprep.subr.bf16.mxu0 0
    %606 = vmatpush1.bf16.xpose.msra.mxu0 %v603
    %607 = vmatprep.subr.bf16.mxu0 0
    %608 = vmatpush1.bf16.xpose.msra.mxu0 0
    %609 = vmatprep.subr.bf16.mxu0 0
    %610 = vmatpush1.bf16.xpose.msra.mxu0 0
    %611 = vmatprep.subr.bf16.mxu0 0
    %612 = vmatpush1.bf16.xpose.msra.mxu0 0
    %613 = vmatprep.subr.bf16.mxu0 0
    %614 = vmatpush1.bf16.xpose.msra.mxu0 0
    %615 = vmatprep.subr.bf16.mxu0 0
    %616 = vmatpush1.bf16.xpose.msra.mxu0 0
    %617 = vmatprep.subr.bf16.mxu0 0
    %618 = vmatpush1.bf16.xpose.msra.mxu0 0
    %619 = vmatprep.subr.bf16.mxu0 0
    %620 = vmatpush1.bf16.xpose.msra.mxu0 0
    %621 = vmatprep.subr.bf16.mxu0 0
    %622 = vmatpush1.bf16.xpose.msra.mxu0 0
    %623 = vmatprep.subr.bf16.mxu0 0
    %624 = vmatpush1.bf16.xpose.msra.mxu0 0
    %625 = vmatprep.subr.bf16.mxu0 0
    %626 = vmatpush1.bf16.xpose.msra.mxu0 0
    %627 = vmatprep.subr.bf16.mxu0 0
    %628 = vmatpush1.bf16.xpose.msra.mxu0 0
    %629 = vmatprep.subr.bf16.mxu0 0
    %630 = vmatpush1.bf16.xpose.msra.mxu0 0
    %631 = vmatprep.subr.bf16.mxu0 0
    %632 = vmatpush1.bf16.xpose.msra.mxu0 0
    %633 = vmatprep.subr.bf16.mxu0 0
    %634 = vmatpush1.bf16.xpose.msra.mxu0 0
    %635 = vmatprep.subr.bf16.mxu0 0
    %636 = vmatpush1.bf16.xpose.msra.mxu0 0
    %637 = vmatprep.mubr.bf16.mxu0 0
    %638 = vmatmul.mubr.bf16.gmra.mrb[0].mxu0 %v600
    %v639 = vpop.f32.mrb[0].mxu0
    %v640 = vadd.f32 0.0, %v639
    %v641 = vpop.f32.mrb[0].mxu0
    %v642 = vpop.f32.mrb[0].mxu0
    %v643 = vpop.f32.mrb[0].mxu0
    %644 = vdwg.mxu0
    %645 = vrot.lane.b32.xlu0 %v141, 112
    %v646 = vpop.permute.xlu0 %645
    %647 = vrot.lane.b32.xlu0 %v143, 80
    %v648 = vpop.permute.xlu0 %647
    %v650 = vsel %vm147, %v646, 0
    %v653 = vsel %vm147, %v648, 0
    %655 = vmatprep.subr.bf16.mxu0 0
    %656 = vmatpush1.bf16.xpose.msra.mxu0 %v653
    %657 = vmatprep.subr.bf16.mxu0 0
    %658 = vmatpush1.bf16.xpose.msra.mxu0 0
    %659 = vmatprep.subr.bf16.mxu0 0
    %660 = vmatpush1.bf16.xpose.msra.mxu0 0
    %661 = vmatprep.subr.bf16.mxu0 0
    %662 = vmatpush1.bf16.xpose.msra.mxu0 0
    %663 = vmatprep.subr.bf16.mxu0 0
    %664 = vmatpush1.bf16.xpose.msra.mxu0 0
    %665 = vmatprep.subr.bf16.mxu0 0
    %666 = vmatpush1.bf16.xpose.msra.mxu0 0
    %667 = vmatprep.subr.bf16.mxu0 0
    %668 = vmatpush1.bf16.xpose.msra.mxu0 0
    %669 = vmatprep.subr.bf16.mxu0 0
    %670 = vmatpush1.bf16.xpose.msra.mxu0 0
    %671 = vmatprep.subr.bf16.mxu0 0
    %672 = vmatpush1.bf16.xpose.msra.mxu0 0
    %673 = vmatprep.subr.bf16.mxu0 0
    %674 = vmatpush1.bf16.xpose.msra.mxu0 0
    %675 = vmatprep.subr.bf16.mxu0 0
    %676 = vmatpush1.bf16.xpose.msra.mxu0 0
    %677 = vmatprep.subr.bf16.mxu0 0
    %678 = vmatpush1.bf16.xpose.msra.mxu0 0
    %679 = vmatprep.subr.bf16.mxu0 0
    %680 = vmatpush1.bf16.xpose.msra.mxu0 0
    %681 = vmatprep.subr.bf16.mxu0 0
    %682 = vmatpush1.bf16.xpose.msra.mxu0 0
    %683 = vmatprep.subr.bf16.mxu0 0
    %684 = vmatpush1.bf16.xpose.msra.mxu0 0
    %685 = vmatprep.subr.bf16.mxu0 0
    %686 = vmatpush1.bf16.xpose.msra.mxu0 0
    %687 = vmatprep.mubr.bf16.mxu0 0
    %688 = vmatmul.mubr.bf16.gmra.mrb[0].mxu0 %v650
    %v689 = vpop.f32.mrb[0].mxu0
    %v690 = vadd.f32 0.0, %v689
    %v691 = vpop.f32.mrb[0].mxu0
    %v692 = vpop.f32.mrb[0].mxu0
    %v693 = vpop.f32.mrb[0].mxu0
    %694 = vdwg.mxu0
    %v695 = vsel %vm147, %v640, -inf
    %696 = vmax.xlane.f32.xlu0 %v695
    %v697 = vpop.xlane.xlu0 %696
    %v698 = vsel %vm147, %v690, -inf
    %699 = vmax.xlane.f32.xlu0 %v698
    %v700 = vpop.xlane.xlu0 %699
    %v701 = vsub.f32 %v640, %v697
    %v702 = vsub.f32 %v690, %v700
    %v703 = vmul.f32 %v701, 1.442695
    %v704 = vpow.pop %v703
    %v705 = vmul.f32 %v702, 1.442695
    %v706 = vpow.pop %v705
    %v707 = vsel %vm147, %v704, 0.0
    %708 = vadd.xlane.f32.xlu0 %v707
    %v709 = vpop.xlane.xlu0 %708
    %v710 = vsel %vm147, %v706, 0.0
    %711 = vadd.xlane.f32.xlu0 %v710
    %v712 = vpop.xlane.xlu0 %711
    %v713 = vrcp.pop %v709
    %v714 = vrcp.pop %v712
    %v715 = vmul.f32 %v704, %v713
    %v716 = vmul.f32 %v706, %v714
    %v717 = vpack.c.bf16 %v715, %v715
    %v718 = vpack.c.bf16 %v716, %v716
    %719 = vrot.lane.b32.xlu0 %v142, 48
    %v720 = vpop.permute.xlu0 %719
    %v722 = vsel %vm147, %v717, 0
    %v725 = vsel %vm272, %v720, 0
    %727 = vmatprep.subr.bf16.mxu0 0
    %728 = vmatpush1.bf16.msra.mxu0 %v725
    %729 = vmatprep.subr.bf16.mxu0 0
    %730 = vmatpush1.bf16.msra.mxu0 0
    %731 = vmatprep.subr.bf16.mxu0 0
    %732 = vmatpush1.bf16.msra.mxu0 0
    %733 = vmatprep.subr.bf16.mxu0 0
    %734 = vmatpush1.bf16.msra.mxu0 0
    %735 = vmatprep.subr.bf16.mxu0 0
    %736 = vmatpush1.bf16.msra.mxu0 0
    %737 = vmatprep.subr.bf16.mxu0 0
    %738 = vmatpush1.bf16.msra.mxu0 0
    %739 = vmatprep.subr.bf16.mxu0 0
    %740 = vmatpush1.bf16.msra.mxu0 0
    %741 = vmatprep.subr.bf16.mxu0 0
    %742 = vmatpush1.bf16.msra.mxu0 0
    %743 = vmatprep.subr.bf16.mxu0 0
    %744 = vmatpush1.bf16.msra.mxu0 0
    %745 = vmatprep.subr.bf16.mxu0 0
    %746 = vmatpush1.bf16.msra.mxu0 0
    %747 = vmatprep.subr.bf16.mxu0 0
    %748 = vmatpush1.bf16.msra.mxu0 0
    %749 = vmatprep.subr.bf16.mxu0 0
    %750 = vmatpush1.bf16.msra.mxu0 0
    %751 = vmatprep.subr.bf16.mxu0 0
    %752 = vmatpush1.bf16.msra.mxu0 0
    %753 = vmatprep.subr.bf16.mxu0 0
    %754 = vmatpush1.bf16.msra.mxu0 0
    %755 = vmatprep.subr.bf16.mxu0 0
    %756 = vmatpush1.bf16.msra.mxu0 0
    %757 = vmatprep.subr.bf16.mxu0 0
    %758 = vmatpush1.bf16.msra.mxu0 0
    %759 = vmatprep.mubr.bf16.mxu0 0
    %760 = vmatmul.mubr.bf16.gmra.mrb[0].mxu0 %v722
    %v761 = vpop.f32.mrb[0].mxu0
    %v762 = vadd.f32 0.0, %v761
    %v763 = vpop.f32.mrb[0].mxu0
    %v764 = vpop.f32.mrb[0].mxu0
    %v765 = vpop.f32.mrb[0].mxu0
    %766 = vdwg.mxu0
    %767 = vrot.lane.b32.xlu0 %v143, 48
    %v768 = vpop.permute.xlu0 %767
    %v770 = vsel %vm147, %v718, 0
    %v773 = vsel %vm272, %v768, 0
    %775 = vmatprep.subr.bf16.mxu0 0
    %776 = vmatpush1.bf16.msra.mxu0 %v773
    %777 = vmatprep.subr.bf16.mxu0 0
    %778 = vmatpush1.bf16.msra.mxu0 0
    %779 = vmatprep.subr.bf16.mxu0 0
    %780 = vmatpush1.bf16.msra.mxu0 0
    %781 = vmatprep.subr.bf16.mxu0 0
    %782 = vmatpush1.bf16.msra.mxu0 0
    %783 = vmatprep.subr.bf16.mxu0 0
    %784 = vmatpush1.bf16.msra.mxu0 0
    %785 = vmatprep.subr.bf16.mxu0 0
    %786 = vmatpush1.bf16.msra.mxu0 0
    %787 = vmatprep.subr.bf16.mxu0 0
    %788 = vmatpush1.bf16.msra.mxu0 0
    %789 = vmatprep.subr.bf16.mxu0 0
    %790 = vmatpush1.bf16.msra.mxu0 0
    %791 = vmatprep.subr.bf16.mxu0 0
    %792 = vmatpush1.bf16.msra.mxu0 0
    %793 = vmatprep.subr.bf16.mxu0 0
    %794 = vmatpush1.bf16.msra.mxu0 0
    %795 = vmatprep.subr.bf16.mxu0 0
    %796 = vmatpush1.bf16.msra.mxu0 0
    %797 = vmatprep.subr.bf16.mxu0 0
    %798 = vmatpush1.bf16.msra.mxu0 0
    %799 = vmatprep.subr.bf16.mxu0 0
    %800 = vmatpush1.bf16.msra.mxu0 0
    %801 = vmatprep.subr.bf16.mxu0 0
    %802 = vmatpush1.bf16.msra.mxu0 0
    %803 = vmatprep.subr.bf16.mxu0 0
    %804 = vmatpush1.bf16.msra.mxu0 0
    %805 = vmatprep.subr.bf16.mxu0 0
    %806 = vmatpush1.bf16.msra.mxu0 0
    %807 = vmatprep.mubr.bf16.mxu0 0
    %808 = vmatmul.mubr.bf16.gmra.mrb[0].mxu0 %v770
    %v809 = vpop.f32.mrb[0].mxu0
    %v810 = vadd.f32 0.0, %v809
    %v811 = vpop.f32.mrb[0].mxu0
    %v812 = vpop.f32.mrb[0].mxu0
    %v813 = vpop.f32.mrb[0].mxu0
    %814 = vdwg.mxu0
    %v815 = vpack.c.bf16 %v810, %v762
    %817 = vrot.lane.b32.xlu0 %v815, 16
    %v818 = vpop.permute.xlu0 %817
    %vm820 = vcmask 195712
    %821 = vst.msk [vmem:[#allocation2] sm:$0xff] %vm820, %v818
    %822 = vrot.lane.b32.xlu0 %v140, 104
    %v823 = vpop.permute.xlu0 %822
    %824 = vrot.lane.b32.xlu0 %v142, 72
    %v825 = vpop.permute.xlu0 %824
    %v827 = vsel %vm147, %v823, 0
    %v830 = vsel %vm147, %v825, 0
    %832 = vmatprep.subr.bf16.mxu0 0
    %833 = vmatpush1.bf16.xpose.msra.mxu0 %v830
    %834 = vmatprep.subr.bf16.mxu0 0
    %835 = vmatpush1.bf16.xpose.msra.mxu0 0
    %836 = vmatprep.subr.bf16.mxu0 0
    %837 = vmatpush1.bf16.xpose.msra.mxu0 0
    %838 = vmatprep.subr.bf16.mxu0 0
    %839 = vmatpush1.bf16.xpose.msra.mxu0 0
    %840 = vmatprep.subr.bf16.mxu0 0
    %841 = vmatpush1.bf16.xpose.msra.mxu0 0
    %842 = vmatprep.subr.bf16.mxu0 0
    %843 = vmatpush1.bf16.xpose.msra.mxu0 0
    %844 = vmatprep.subr.bf16.mxu0 0
    %845 = vmatpush1.bf16.xpose.msra.mxu0 0
    %846 = vmatprep.subr.bf16.mxu0 0
    %847 = vmatpush1.bf16.xpose.msra.mxu0 0
    %848 = vmatprep.subr.bf16.mxu0 0
    %849 = vmatpush1.bf16.xpose.msra.mxu0 0
    %850 = vmatprep.subr.bf16.mxu0 0
    %851 = vmatpush1.bf16.xpose.msra.mxu0 0
    %852 = vmatprep.subr.bf16.mxu0 0
    %853 = vmatpush1.bf16.xpose.msra.mxu0 0
    %854 = vmatprep.subr.bf16.mxu0 0
    %855 = vmatpush1.bf16.xpose.msra.mxu0 0
    %856 = vmatprep.subr.bf16.mxu0 0
    %857 = vmatpush1.bf16.xpose.msra.mxu0 0
    %858 = vmatprep.subr.bf16.mxu0 0
    %859 = vmatpush1.bf16.xpose.msra.mxu0 0
    %860 = vmatprep.subr.bf16.mxu0 0
    %861 = vmatpush1.bf16.xpose.msra.mxu0 0
    %862 = vmatprep.subr.bf16.mxu0 0
    %863 = vmatpush1.bf16.xpose.msra.mxu0 0
    %864 = vmatprep.mubr.bf16.mxu0 0
    %865 = vmatmul.mubr.bf16.gmra.mrb[0].mxu0 %v827
    %v866 = vpop.f32.mrb[0].mxu0
    %v867 = vadd.f32 0.0, %v866
    %v868 = vpop.f32.mrb[0].mxu0
    %v869 = vpop.f32.mrb[0].mxu0
    %v870 = vpop.f32.mrb[0].mxu0
    %871 = vdwg.mxu0
    %872 = vrot.lane.b32.xlu0 %v141, 104
    %v873 = vpop.permute.xlu0 %872
    %874 = vrot.lane.b32.xlu0 %v143, 72
    %v875 = vpop.permute.xlu0 %874
    %v877 = vsel %vm147, %v873, 0
    %v880 = vsel %vm147, %v875, 0
    %882 = vmatprep.subr.bf16.mxu0 0
    %883 = vmatpush1.bf16.xpose.msra.mxu0 %v880
    %884 = vmatprep.subr.bf16.mxu0 0
    %885 = vmatpush1.bf16.xpose.msra.mxu0 0
    %886 = vmatprep.subr.bf16.mxu0 0
    %887 = vmatpush1.bf16.xpose.msra.mxu0 0
    %888 = vmatprep.subr.bf16.mxu0 0
    %889 = vmatpush1.bf16.xpose.msra.mxu0 0
    %890 = vmatprep.subr.bf16.mxu0 0
    %891 = vmatpush1.bf16.xpose.msra.mxu0 0
    %892 = vmatprep.subr.bf16.mxu0 0
    %893 = vmatpush1.bf16.xpose.msra.mxu0 0
    %894 = vmatprep.subr.bf16.mxu0 0
    %895 = vmatpush1.bf16.xpose.msra.mxu0 0
    %896 = vmatprep.subr.bf16.mxu0 0
    %897 = vmatpush1.bf16.xpose.msra.mxu0 0
    %898 = vmatprep.subr.bf16.mxu0 0
    %899 = vmatpush1.bf16.xpose.msra.mxu0 0
    %900 = vmatprep.subr.bf16.mxu0 0
    %901 = vmatpush1.bf16.xpose.msra.mxu0 0
    %902 = vmatprep.subr.bf16.mxu0 0
    %903 = vmatpush1.bf16.xpose.msra.mxu0 0
    %904 = vmatprep.subr.bf16.mxu0 0
    %905 = vmatpush1.bf16.xpose.msra.mxu0 0
    %906 = vmatprep.subr.bf16.mxu0 0
    %907 = vmatpush1.bf16.xpose.msra.mxu0 0
    %908 = vmatprep.subr.bf16.mxu0 0
    %909 = vmatpush1.bf16.xpose.msra.mxu0 0
    %910 = vmatprep.subr.bf16.mxu0 0
    %911 = vmatpush1.bf16.xpose.msra.mxu0 0
    %912 = vmatprep.subr.bf16.mxu0 0
    %913 = vmatpush1.bf16.xpose.msra.mxu0 0
    %914 = vmatprep.mubr.bf16.mxu0 0
    %915 = vmatmul.mubr.bf16.gmra.mrb[0].mxu0 %v877
    %v916 = vpop.f32.mrb[0].mxu0
    %v917 = vadd.f32 0.0, %v916
    %v918 = vpop.f32.mrb[0].mxu0
    %v919 = vpop.f32.mrb[0].mxu0
    %v920 = vpop.f32.mrb[0].mxu0
    %921 = vdwg.mxu0
    %v922 = vsel %vm147, %v867, -inf
    %923 = vmax.xlane.f32.xlu0 %v922
    %v924 = vpop.xlane.xlu0 %923
    %v925 = vsel %vm147, %v917, -inf
    %926 = vmax.xlane.f32.xlu0 %v925
    %v927 = vpop.xlane.xlu0 %926
    %v928 = vsub.f32 %v867, %v924
    %v929 = vsub.f32 %v917, %v927
    %v930 = vmul.f32 %v928, 1.442695
    %v931 = vpow.pop %v930
    %v932 = vmul.f32 %v929, 1.442695
    %v933 = vpow.pop %v932
    %v934 = vsel %vm147, %v931, 0.0
    %935 = vadd.xlane.f32.xlu0 %v934
    %v936 = vpop.xlane.xlu0 %935
    %v937 = vsel %vm147, %v933, 0.0
    %938 = vadd.xlane.f32.xlu0 %v937
    %v939 = vpop.xlane.xlu0 %938
    %v940 = vrcp.pop %v936
    %v941 = vrcp.pop %v939
    %v942 = vmul.f32 %v931, %v940
    %v943 = vmul.f32 %v933, %v941
    %v944 = vpack.c.bf16 %v942, %v942
    %v945 = vpack.c.bf16 %v943, %v943
    %946 = vrot.lane.b32.xlu0 %v142, 40
    %v947 = vpop.permute.xlu0 %946
    %v949 = vsel %vm147, %v944, 0
    %v952 = vsel %vm272, %v947, 0
    %954 = vmatprep.subr.bf16.mxu0 0
    %955 = vmatpush1.bf16.msra.mxu0 %v952
    %956 = vmatprep.subr.bf16.mxu0 0
    %957 = vmatpush1.bf16.msra.mxu0 0
    %958 = vmatprep.subr.bf16.mxu0 0
    %959 = vmatpush1.bf16.msra.mxu0 0
    %960 = vmatprep.subr.bf16.mxu0 0
    %961 = vmatpush1.bf16.msra.mxu0 0
    %962 = vmatprep.subr.bf16.mxu0 0
    %963 = vmatpush1.bf16.msra.mxu0 0
    %964 = vmatprep.subr.bf16.mxu0 0
    %965 = vmatpush1.bf16.msra.mxu0 0
    %966 = vmatprep.subr.bf16.mxu0 0
    %967 = vmatpush1.bf16.msra.mxu0 0
    %968 = vmatprep.subr.bf16.mxu0 0
    %969 = vmatpush1.bf16.msra.mxu0 0
    %970 = vmatprep.subr.bf16.mxu0 0
    %971 = vmatpush1.bf16.msra.mxu0 0
    %972 = vmatprep.subr.bf16.mxu0 0
    %973 = vmatpush1.bf16.msra.mxu0 0
    %974 = vmatprep.subr.bf16.mxu0 0
    %975 = vmatpush1.bf16.msra.mxu0 0
    %976 = vmatprep.subr.bf16.mxu0 0
    %977 = vmatpush1.bf16.msra.mxu0 0
    %978 = vmatprep.subr.bf16.mxu0 0
    %979 = vmatpush1.bf16.msra.mxu0 0
    %980 = vmatprep.subr.bf16.mxu0 0
    %981 = vmatpush1.bf16.msra.mxu0 0
    %982 = vmatprep.subr.bf16.mxu0 0
    %983 = vmatpush1.bf16.msra.mxu0 0
    %984 = vmatprep.subr.bf16.mxu0 0
    %985 = vmatpush1.bf16.msra.mxu0 0
    %986 = vmatprep.mubr.bf16.mxu0 0
    %987 = vmatmul.mubr.bf16.gmra.mrb[0].mxu0 %v949
    %v988 = vpop.f32.mrb[0].mxu0
    %v989 = vadd.f32 0.0, %v988
    %v990 = vpop.f32.mrb[0].mxu0
    %v991 = vpop.f32.mrb[0].mxu0
    %v992 = vpop.f32.mrb[0].mxu0
    %993 = vdwg.mxu0
    %994 = vrot.lane.b32.xlu0 %v143, 40
    %v995 = vpop.permute.xlu0 %994
    %v997 = vsel %vm147, %v945, 0
    %v1000 = vsel %vm272, %v995, 0
    %1002 = vmatprep.subr.bf16.mxu0 0
    %1003 = vmatpush1.bf16.msra.mxu0 %v1000
    %1004 = vmatprep.subr.bf16.mxu0 0
    %1005 = vmatpush1.bf16.msra.mxu0 0
    %1006 = vmatprep.subr.bf16.mxu0 0
    %1007 = vmatpush1.bf16.msra.mxu0 0
    %1008 = vmatprep.subr.bf16.mxu0 0
    %1009 = vmatpush1.bf16.msra.mxu0 0
    %1010 = vmatprep.subr.bf16.mxu0 0
    %1011 = vmatpush1.bf16.msra.mxu0 0
    %1012 = vmatprep.subr.bf16.mxu0 0
    %1013 = vmatpush1.bf16.msra.mxu0 0
    %1014 = vmatprep.subr.bf16.mxu0 0
    %1015 = vmatpush1.bf16.msra.mxu0 0
    %1016 = vmatprep.subr.bf16.mxu0 0
    %1017 = vmatpush1.bf16.msra.mxu0 0
    %1018 = vmatprep.subr.bf16.mxu0 0
    %1019 = vmatpush1.bf16.msra.mxu0 0
    %1020 = vmatprep.subr.bf16.mxu0 0
    %1021 = vmatpush1.bf16.msra.mxu0 0
    %1022 = vmatprep.subr.bf16.mxu0 0
    %1023 = vmatpush1.bf16.msra.mxu0 0
    %1024 = vmatprep.subr.bf16.mxu0 0
    %1025 = vmatpush1.bf16.msra.mxu0 0
    %1026 = vmatprep.subr.bf16.mxu0 0
    %1027 = vmatpush1.bf16.msra.mxu0 0
    %1028 = vmatprep.subr.bf16.mxu0 0
    %1029 = vmatpush1.bf16.msra.mxu0 0
    %1030 = vmatprep.subr.bf16.mxu0 0
    %1031 = vmatpush1.bf16.msra.mxu0 0
    %1032 = vmatprep.subr.bf16.mxu0 0
    %1033 = vmatpush1.bf16.msra.mxu0 0
    %1034 = vmatprep.mubr.bf16.mxu0 0
    %1035 = vmatmul.mubr.bf16.gmra.mrb[0].mxu0 %v997
    %v1036 = vpop.f32.mrb[0].mxu0
    %v1037 = vadd.f32 0.0, %v1036
    %v1038 = vpop.f32.mrb[0].mxu0
    %v1039 = vpop.f32.mrb[0].mxu0
    %v1040 = vpop.f32.mrb[0].mxu0
    %1041 = vdwg.mxu0
    %v1042 = vpack.c.bf16 %v1037, %v989
    %1044 = vrot.lane.b32.xlu0 %v1042, 24
    %v1045 = vpop.permute.xlu0 %1044
    %vm1047 = vcmask 261312
    %1048 = vst.msk [vmem:[#allocation2] sm:$0xff] %vm1047, %v1045
    %v1049 = vld [vmem:[#allocation2] sm:$0xff]
    %v1050 = vld [vmem:[#allocation8] sm:$0xf]
    %v1051 = vld [vmem:[#allocation8 + $0x4] sm:$0xf]
    %v1052 = vld [vmem:[#allocation8 + $0x8] sm:$0xf]
    %v1053 = vld [vmem:[#allocation8 + $0xc] sm:$0xf]
    %v1054 = vld [vmem:[%s4] sm:$0x1]
    %v1056 = vlaneseq
    %v1057 = vshrl.u32 %v1056, 7
    %v1058 = vsub.s32 0, %v1057
    %v1059 = vrot.slane %v1054, %v1058
    %v1065 = vunpack.c.l.b16 %v1050
    %v1066 = vunpack.c.l.b16 %v1051
    %v1067 = vunpack.c.l.b16 %v1052
    %v1068 = vunpack.c.l.b16 %v1053
    %v1069 = vpack.c.b16 %v1066, %v1065
    %v1070 = vpack.c.b16 %v1068, %v1067
    %v1074 = vsel %vm93, %v1049, 0
    %1076 = vmatprep.subr.bf16.mxu0 0
    %1077 = vmatpush1.bf16.msra.mxu0 %v1069
    %1078 = vmatprep.subr.bf16.mxu0 0
    %1079 = vmatpush1.bf16.msra.mxu0 %v1070
    %1080 = vmatprep.subr.bf16.mxu0 0
    %1081 = vmatpush1.bf16.msra.mxu0 0
    %1082 = vmatprep.subr.bf16.mxu0 0
    %1083 = vmatpush1.bf16.msra.mxu0 0
    %1084 = vmatprep.subr.bf16.mxu0 0
    %1085 = vmatpush1.bf16.msra.mxu0 0
    %1086 = vmatprep.subr.bf16.mxu0 0
    %1087 = vmatpush1.bf16.msra.mxu0 0
    %1088 = vmatprep.subr.bf16.mxu0 0
    %1089 = vmatpush1.bf16.msra.mxu0 0
    %1090 = vmatprep.subr.bf16.mxu0 0
    %1091 = vmatpush1.bf16.msra.mxu0 0
    %1092 = vmatprep.subr.bf16.mxu0 0
    %1093 = vmatpush1.bf16.msra.mxu0 0
    %1094 = vmatprep.subr.bf16.mxu0 0
    %1095 = vmatpush1.bf16.msra.mxu0 0
    %1096 = vmatprep.subr.bf16.mxu0 0
    %1097 = vmatpush1.bf16.msra.mxu0 0
    %1098 = vmatprep.subr.bf16.mxu0 0
    %1099 = vmatpush1.bf16.msra.mxu0 0
    %1100 = vmatprep.subr.bf16.mxu0 0
    %1101 = vmatpush1.bf16.msra.mxu0 0
    %1102 = vmatprep.subr.bf16.mxu0 0
    %1103 = vmatpush1.bf16.msra.mxu0 0
    %1104 = vmatprep.subr.bf16.mxu0 0
    %1105 = vmatpush1.bf16.msra.mxu0 0
    %1106 = vmatprep.subr.bf16.mxu0 0
    %1107 = vmatpush1.bf16.msra.mxu0 0
    %1108 = vmatprep.mubr.bf16.mxu0 0
    %1109 = vmatmul.mubr.bf16.gmra.mrb[0].mxu0 %v1074
    %v1110 = vpop.f32.mrb[0].mxu0
    %v1111 = vadd.f32 %v1059, %v1110
    %v1112 = vpop.f32.mrb[0].mxu0
    %v1113 = vpop.f32.mrb[0].mxu0
    %v1114 = vadd.f32 %v1059, %v1113
    %v1115 = vpop.f32.mrb[0].mxu0
    %1116 = vdwg.mxu0
    %1117 = vst.msk [vmem:[#allocation9] sm:$0xff] %vm93, %v1111
    %1118 = vst.msk [vmem:[#allocation9 + $0x8] sm:$0xff] %vm93, %v1114
    // Predicated region
    $region34: #{tpu_custom_call.1} parent=1 // pred_check
      _
    $region35: #{tpu_custom_call.1} parent=1 // pred_check_branch
      %1120 = sbr.rel (0) target = $region37
    $region36: #{tpu_custom_call.1} parent=1 // pred_region
      %s1122 = ssub.s32 256, 256
      %1123 = vsyncadd [#allocation5], %s1122
      %s1124 = sshll.u32 [#allocation9], 4
      %s1125 = int_to_ptr.vmem [resolvable:$true] %s1124
      %1130 = dma.vmem_to_hbm [thread:$0]  %s1125, 256, %s5, [#allocation5], 128, 128, 8
    $region37: #{tpu_custom_call.1} parent=1 // pred_fallthru
      _
    // Predicated region
    $region38: #{tpu_custom_call.1} parent=1 // pred_check
      _
    $region39: #{tpu_custom_call.1} parent=1 // pred_check_branch
      %1132 = sbr.rel (0) target = $region41
    $region40: #{tpu_custom_call.1} parent=1 // pred_region
      %1133 = dma.done [#allocation5], 256
    $region41: #{tpu_custom_call.1} parent=1 // pred_fallthru
      _
    %1134 = vsyncpa [#allocation4], 1
    %1135 = vsyncpa [#allocation7], 1
    %1136 = vsyncpa [#allocation5], 1

</llo_original>
